<compile_context>
chip_gen: v7x
topology: tpu7x:2x2x1
jax: 0.10.0
libtpu: 0.0.40
codegen_flags: <defaults>
</compile_context>

<pallas_src>
import jax
import jax.numpy as jnp
from jax.experimental import pallas as pl
from jax.experimental.pallas import tpu as pltpu


# ---------------------------------------------------------------------------
# Kernel: one (TR, TL) tile of the flattened image; per-row scale/bias columns.
# ---------------------------------------------------------------------------
def _normalizer_kernel(x_ref, scale_ref, bias_ref, o_ref):
    x = x_ref[...].astype(jnp.float32)       # (TR, TL)
    scale = scale_ref[...]                   # (TR, 1) f32, broadcasts over lanes
    bias = bias_ref[...]                     # (TR, 1) f32
    # (x - mean) / std  ==  x * (1/std) + (-mean/std)
    o_ref[...] = (x * scale + bias).astype(o_ref.dtype)


# ---------------------------------------------------------------------------
# Tile sizing: constant bytes per step, generation + dtype aware.
# ---------------------------------------------------------------------------
def _pick_tiles(r, hw, itemsize):
    # Per-buffer byte target: 2 MiB on v5e (16 MiB scoped-VMEM default),
    # 4 MiB on v6e / v7x / anything newer (32 MiB scoped default).
    try:
        kind = jax.devices()[0].device_kind.lower()
    except Exception:  # pragma: no cover - defensive; fall back to safe size
        kind = ""
    target_bytes = (2 << 20) if ("v5" in kind) else (4 << 20)

    # Row tile: multiple of 32 (covers f32 / bf16 / int8 sublane packing).
    row_tile = 256
    # Lane tile: multiple of 128, sized so row_tile * lane_tile * itemsize
    # ~= target_bytes regardless of dtype (constant DMA volume per step).
    lane_tile = max(128, (target_bytes // (row_tile * itemsize)) // 128 * 128)

    # Use the full dim when it is smaller than the tile (valid per the
    # (8,128)-or-full-dim rule); otherwise the aligned tile with masked tails.
    tr = r if r <= row_tile else row_tile
    tl = hw if hw <= lane_tile else lane_tile
    return tr, tl


# ---------------------------------------------------------------------------
# Wrapper
# ---------------------------------------------------------------------------
def normalizer_forward(img, mean, std):
    """(img - mean[None,:,None,None]) / std[None,:,None,None] for NCHW img."""
    n, c, h, w = img.shape
    r, hw = n * c, h * w

    # Flatten to a lane-dense 2-D slab: rows = (n, c), lanes = spatial.
    x2d = jnp.reshape(img, (r, hw))

    # Precompute per-row scale/bias columns (tiny: N*C f32 elements each).
    # Row k corresponds to channel k % C, matching jnp.tile ordering.
    inv_std = 1.0 / std.astype(jnp.float32)
    scale_rows = jnp.reshape(jnp.tile(inv_std, n), (r, 1))
    bias_rows = jnp.reshape(jnp.tile(-mean.astype(jnp.float32) * inv_std, n),
                            (r, 1))

    itemsize = jnp.dtype(img.dtype).itemsize
    tr, tl = _pick_tiles(r, hw, itemsize)
    grid = (pl.cdiv(r, tr), pl.cdiv(hw, tl))   # lane axis last = fastest

    cost = pl.CostEstimate(
        flops=2 * r * hw,                       # one mul + one add per element
        transcendentals=0,
        bytes_accessed=2 * r * hw * itemsize + 2 * r * 4,
    )

    out2d = pl.pallas_call(
        _normalizer_kernel,
        out_shape=jax.ShapeDtypeStruct((r, hw), img.dtype),
        grid=grid,
        in_specs=[
            pl.BlockSpec((tr, tl), lambda i, j: (i, j)),   # image tile
            pl.BlockSpec((tr, 1), lambda i, j: (i, 0)),    # scale (resident over j)
            pl.BlockSpec((tr, 1), lambda i, j: (i, 0)),    # bias  (resident over j)
        ],
        out_specs=pl.BlockSpec((tr, tl), lambda i, j: (i, j)),
        compiler_params=pltpu.CompilerParams(
            dimension_semantics=("parallel", "parallel")),
        cost_estimate=cost,
    )(x2d, scale_rows, bias_rows)

    return jnp.reshape(out2d, (n, c, h, w))


# ---------------------------------------------------------------------------
# Normalizer "module"
# ---------------------------------------------------------------------------
class NormalizerPallas:
    def __init__(self, mean, std):
        # Store per-channel statistics; device placement is handled by JAX
        # (the `device` arg of the torch module has no Pallas equivalent).
        self.mean = jnp.asarray(mean, dtype=jnp.float32)
        self.std = jnp.asarray(std, dtype=jnp.float32)

    def __call__(self, img):
        return normalizer_forward(img, self.mean, self.std)


# ---------------------------------------------------------------------------
def _reference(img, mean, std):
    return (img - mean[None, :, None, None]) / std[None, :, None, None]


if __name__ == "__main__":
    key = jax.random.PRNGKey(0)
    # Small shapes consistent with the module: batch=2, channels=4, 16x16 spatial.
    img = jax.random.normal(key, (2, 4, 16, 16), dtype=jnp.float32)
    mean = jnp.array([0.485, 0.456, 0.406, 0.5], dtype=jnp.float32)
    std = jnp.array([0.229, 0.224, 0.225, 0.25], dtype=jnp.float32)

    module = NormalizerPallas(mean, std)
    out = jax.block_until_ready(module(img))

    ref = jax.block_until_ready(_reference(img, mean, std))
    assert out.shape == ref.shape, (out.shape, ref.shape)
    # Reciprocal/FMA form differs from true division by ~1-2 ulp.
    assert jnp.allclose(out, ref, rtol=1e-5, atol=1e-5), (
        float(jnp.max(jnp.abs(out - ref))))

    print("KERNEL_OK")
</pallas_src>

<mosaic_0001>
module attributes {stable_mosaic.version = 11 : i64} {
  func.func @_normalizer_kernel(%arg0: i32, %arg1: i32, %arg2: memref<8x256xf32, #tpu.memory_space<vmem>>, %arg3: memref<8x1xf32, #tpu.memory_space<vmem>>, %arg4: memref<8x1xf32, #tpu.memory_space<vmem>>, %arg5: memref<8x256xf32, #tpu.memory_space<vmem>>) attributes {dimension_semantics = [#tpu.dimension_semantics<parallel>, #tpu.dimension_semantics<parallel>], iteration_bounds = array<i64: 1, 1>, scalar_prefetch = 0 : i64, scratch_operands = 0 : i64, tpu.core_type = #tpu.core_type<tc>, window_params = [{transform_indices = @transform_0, window_bounds = array<i64: 8, 256>}, {transform_indices = @transform_1, window_bounds = array<i64: 8, 1>}, {transform_indices = @transform_2, window_bounds = array<i64: 8, 1>}, {transform_indices = @transform_3, window_bounds = array<i64: 8, 256>}]} {
    %c0 = arith.constant 0 : index
    %c0_0 = arith.constant 0 : index
    %0 = vector.load %arg2[%c0, %c0_0] : memref<8x256xf32, #tpu.memory_space<vmem>>, vector<8x256xf32>
    %c0_1 = arith.constant 0 : index
    %c0_2 = arith.constant 0 : index
    %1 = vector.load %arg3[%c0_1, %c0_2] : memref<8x1xf32, #tpu.memory_space<vmem>>, vector<8x1xf32>
    %c0_3 = arith.constant 0 : index
    %c0_4 = arith.constant 0 : index
    %2 = vector.load %arg4[%c0_3, %c0_4] : memref<8x1xf32, #tpu.memory_space<vmem>>, vector<8x1xf32>
    %3 = vector.broadcast %1 : vector<8x1xf32> to vector<8x256xf32>
    %4 = arith.mulf %0, %3 : vector<8x256xf32>
    %5 = vector.broadcast %2 : vector<8x1xf32> to vector<8x256xf32>
    %6 = arith.addf %4, %5 : vector<8x256xf32>
    %c0_5 = arith.constant 0 : index
    %c0_6 = arith.constant 0 : index
    %7 = vector.load %arg5[%c0_5, %c0_6] : memref<8x256xf32, #tpu.memory_space<vmem>>, vector<8x256xf32>
    tpu.vector_store %arg5[%c0_5, %c0_6], %6 {strides = array<i32>} : memref<8x256xf32, #tpu.memory_space<vmem>>, vector<8x256xf32>,
    return
  }
  func.func @transform_0(%arg0: i32, %arg1: i32) -> (i32, i32) {
    %c0_i32 = arith.constant 0 : i32
    return %arg0, %arg1 : i32, i32
  }
  func.func @transform_1(%arg0: i32, %arg1: i32) -> (i32, i32) {
    %c0_i32 = arith.constant 0 : i32
    %c0_i32_0 = arith.constant 0 : i32
    return %arg0, %c0_i32 : i32, i32
  }
  func.func @transform_2(%arg0: i32, %arg1: i32) -> (i32, i32) {
    %c0_i32 = arith.constant 0 : i32
    %c0_i32_0 = arith.constant 0 : i32
    return %arg0, %c0_i32 : i32, i32
  }
  func.func @transform_3(%arg0: i32, %arg1: i32) -> (i32, i32) {
    %c0_i32 = arith.constant 0 : i32
    return %arg0, %arg1 : i32, i32
  }
}

</mosaic_0001>

<llo_original>
// kernel: tpu_custom_call.1
$region0: #{tpu_custom_call.1}
  #allocation0 [shape = 'u32[]', space=smem, size = 0x4, offset = 0x4, fixed_abs, tag = 'smem constant byte address 0x4 - core index']
  #allocation1 [shape = 'u32[144,128]{1,0:T(1,128)}', space=vmem, size = 0x12000, scoped, tag = 'internal scratch']
  %s0 = inlined_call_operand.vmem [shape: f32[8,256], index: 0, kind: input, shape index: {}]
  %s1 = inlined_call_operand.vmem [shape: f32[8,1], index: 1, kind: input, shape index: {}]
  %s2 = inlined_call_operand.vmem [shape: f32[8,1], index: 2, kind: input, shape index: {}]
  %s3 = inlined_call_operand.hbm [shape: f32[8,256], index: 3, kind: output, shape index: {}]
  %s4 = sld [smem:[#allocation0]]
  $region22: #{tpu_custom_call.1} parent=0
    _
  %s6 = ssub.s32 1, %s4
  %s7 = scalar_select 0, %s6, %s4
  $region1: #{tpu_custom_call.1} parent=0
    #allocation2 [shape = 'u8[8192]{0}', space=vmem, size = 0x2000, scoped, tag = 'output window, operand 0, single buffered']
    #allocation3 [shape = 's32[1]{0}', space=sflag, size = 0x4, scoped, tag = 'scoped memory for tpu_custom_call.1']
    %8 = vsyncpa [#allocation3], 0
    // Predicated region
    $region2: #{tpu_custom_call.1} parent=1 // pred_check
      _
    $region3: #{tpu_custom_call.1} parent=1 // pred_check_branch
      %10 = sbr.rel (0) target = $region5
    $region4: #{tpu_custom_call.1} parent=1 // pred_region
      _
    $region5: #{tpu_custom_call.1} parent=1 // pred_fallthru
      _
    // Predicated region
    $region6: #{tpu_custom_call.1} parent=1 // pred_check
      _
    $region7: #{tpu_custom_call.1} parent=1 // pred_check_branch
      %12 = sbr.rel (0) target = $region9
    $region8: #{tpu_custom_call.1} parent=1 // pred_region
      _
    $region9: #{tpu_custom_call.1} parent=1 // pred_fallthru
      _
    // Predicated region
    $region10: #{tpu_custom_call.1} parent=1 // pred_check
      _
    $region11: #{tpu_custom_call.1} parent=1 // pred_check_branch
      %14 = sbr.rel (0) target = $region13
    $region12: #{tpu_custom_call.1} parent=1 // pred_region
      _
    $region13: #{tpu_custom_call.1} parent=1 // pred_fallthru
      _
    %v15 = vld [vmem:[%s0] sm:$0xff]
    %v16 = vld [vmem:[%s0 + $0x8] sm:$0xff]
    %v17 = vld [vmem:[%s1] sm:$0xff]
    %v18 = vld [vmem:[%s2] sm:$0xff]
    %20 = vset.pattern.permute.xlu0 0
    %21 = vperm.xlu0 %20, %v17
    %v22 = vpop.permute.xlu0 %21
    %v24 = vmul.f32 %v15, %v22
    %v25 = vmul.f32 %v16, %v22
    %27 = vset.pattern.permute.xlu0 0
    %28 = vperm.xlu0 %27, %v18
    %v29 = vpop.permute.xlu0 %28
    %v31 = vadd.f32 %v24, %v29
    %v32 = vadd.f32 %v25, %v29
    %33 = vst [vmem:[#allocation2] sm:$0xff] %v31
    %34 = vst [vmem:[#allocation2 + $0x8] sm:$0xff] %v32
    // Predicated region
    $region14: #{tpu_custom_call.1} parent=1 // pred_check
      _
    $region15: #{tpu_custom_call.1} parent=1 // pred_check_branch
      %36 = sbr.rel (0) target = $region17
    $region16: #{tpu_custom_call.1} parent=1 // pred_region
      %s38 = ssub.s32 256, 256
      %39 = vsyncadd [#allocation3], %s38
      %s41 = sshll.u32 [#allocation2], 4
      %s42 = int_to_ptr.vmem [resolvable:$true] %s41
      %44 = dma.vmem_to_hbm [thread:$0]  %s42, 256, %s3, [#allocation3]
    $region17: #{tpu_custom_call.1} parent=1 // pred_fallthru
      _
    // Predicated region
    $region18: #{tpu_custom_call.1} parent=1 // pred_check
      _
    $region19: #{tpu_custom_call.1} parent=1 // pred_check_branch
      %46 = sbr.rel (0) target = $region21
    $region20: #{tpu_custom_call.1} parent=1 // pred_region
      %47 = dma.done [#allocation3], 256
    $region21: #{tpu_custom_call.1} parent=1 // pred_fallthru
      _
    %48 = vsyncpa [#allocation3], 1

</llo_original>
